<compile_context>
chip_gen: v5e
topology: v5e:2x2
jax: 0.10.0
libtpu: 0.0.40
codegen_flags: <defaults>
</compile_context>

<pallas_src>
import jax
import jax.numpy as jnp
from jax.experimental import pallas as pl
from jax.experimental.pallas import tpu as pltpu


def _noise_kernel(x_ref, n_ref, w_ref, o_ref):
    # x: (TB, C, HWT)   n: (TB, 1, HWT)   w: (C, 1)   o: (TB, C, HWT)
    # (1, C, 1) * (TB, 1, HWT) -> (TB, C, HWT): weight broadcasts along lanes,
    # noise broadcasts along the channel sublanes; one fused VPU pass.
    o_ref[...] = x_ref[...] + w_ref[...][None, :, :] * n_ref[...]


def _vmem_capacity_bytes():
    """Physical per-core VMEM, with a conservative (v7x, 64 MiB) fallback."""
    try:
        cap = getattr(pltpu.get_tpu_info(), "vmem_capacity_bytes", None)
        if cap:
            return int(cap)
    except Exception:
        pass
    return 64 * 1024 * 1024


def noise_layer(x, weight, noise=None, key=None):
    """Pallas implementation of NoiseLayer.forward.

    x:      (B, C, H, W)
    weight: (C,)
    noise:  (B, 1, H, W) or None (None -> fresh standard-normal noise, needs `key`)
    """
    b, c, h, w = x.shape
    hw = h * w

    if noise is None:
        # Module default path: fresh per-pixel N(0,1) noise (torch.randn branch).
        # TODO(synk): fuse this into the kernel with pltpu.prng_seed/prng_random_bits
        # to avoid one HBM round-trip of the (B,1,H,W) noise tensor.
        assert key is not None, "need a PRNG key when noise is None"
        noise = jax.random.normal(key, (b, 1, h, w), dtype=x.dtype)

    # Lane-dense views: trailing dim is H*W, not W.
    x3 = x.reshape(b, c, hw)
    n3 = noise.reshape(b, 1, hw)
    w2 = weight.reshape(c, 1).astype(x.dtype)

    itemsize = jnp.dtype(x.dtype).itemsize
    # Sublane pack: 8 rows for 4-byte dtypes, 16 for 2-byte, 32 for 1-byte.
    pack = 8 * max(1, 4 // itemsize)
    c_pad = pl.cdiv(c, pack) * pack  # VMEM sublane padding of the C axis

    # ---- generation-aware block budget -----------------------------------
    vmem_cap = _vmem_capacity_bytes()          # 128 MiB v5e/v6e, 64 MiB v7x
    per_set_budget = vmem_cap // 5             # double-buffered -> <= 40% of VMEM
    vmem_limit = int(min((vmem_cap * 3) // 4, 100 * 1024 * 1024))

    # Bytes per batch row per lane for one in+noise+out block set (VMEM-padded).
    row_cost_per_lane = (2 * c_pad + pack) * itemsize

    # ---- HW tile (lane axis): as big as the budget allows, 128-aligned -----
    max_lanes = per_set_budget // row_cost_per_lane
    if max_lanes >= hw:
        hwt = hw                                        # full trailing dim (always legal)
    else:
        # 128-aligned partial tile; last block (if any) is masked by Pallas.
        hwt = min(hw, max(128, (max_lanes // 128) * 128))
    n_hw = pl.cdiv(hw, hwt)

    # ---- batch tile: cdiv grid, no divisor search --------------------------
    per_row_bytes = row_cost_per_lane * hwt
    tb = int(max(1, min(b, per_set_budget // max(1, per_row_bytes))))
    n_b = pl.cdiv(b, tb)

    # Guarantee >= 2 grid steps when possible so both v7x TensorCores get work.
    if n_b * n_hw < 2:
        if b > 1:
            tb = pl.cdiv(b, 2)
            n_b = pl.cdiv(b, tb)
        elif hw >= 256:
            hwt = pl.cdiv(pl.cdiv(hw, 2), 128) * 128
            n_hw = pl.cdiv(hw, hwt)

    grid = (n_b, n_hw)

    cost = pl.CostEstimate(
        flops=2 * b * c * hw,  # one mul + one add per output element
        transcendentals=0,
        bytes_accessed=(x3.size + n3.size + w2.size + b * c * hw) * itemsize,
    )

    out3 = pl.pallas_call(
        _noise_kernel,
        out_shape=jax.ShapeDtypeStruct((b, c, hw), x.dtype),
        grid_spec=pltpu.PrefetchScalarGridSpec(
            num_scalar_prefetch=0,
            grid=grid,
            in_specs=[
                pl.BlockSpec((tb, c, hwt), lambda i, j: (i, 0, j)),   # x
                pl.BlockSpec((tb, 1, hwt), lambda i, j: (i, 0, j)),   # noise
                pl.BlockSpec((c, 1), lambda i, j: (0, 0)),            # weight (tiny, replicated)
            ],
            out_specs=pl.BlockSpec((tb, c, hwt), lambda i, j: (i, 0, j)),
        ),
        compiler_params=pltpu.CompilerParams(
            dimension_semantics=("parallel", "parallel"),
            vmem_limit_bytes=vmem_limit,
        ),
        cost_estimate=cost,
    )(x3, n3, w2)

    return out3.reshape(b, c, h, w)


def noise_layer_ref(x, weight, noise):
    """Pure-JAX reference mirroring the PyTorch forward exactly."""
    return x + weight.reshape(1, -1, 1, 1) * noise


if __name__ == "__main__":
    key = jax.random.PRNGKey(0)
    kx, kw, kn, kx2, kn2 = jax.random.split(key, 5)

    B, C, H, W = 2, 4, 16, 16
    x = jax.random.normal(kx, (B, C, H, W), dtype=jnp.float32)
    # PyTorch initializes weight to zeros; use random values so the weighted
    # noise path is actually exercised.
    weight = jax.random.normal(kw, (C,), dtype=jnp.float32)
    noise = jax.random.normal(kn, (B, 1, H, W), dtype=jnp.float32)

    z = jax.block_until_ready(noise_layer(x, weight, noise))
    z_ref = noise_layer_ref(x, weight, noise)
    assert z.shape == (B, C, H, W), z.shape
    assert jnp.allclose(z, z_ref, atol=1e-6, rtol=1e-6), float(
        jnp.max(jnp.abs(z - z_ref))
    )

    # Awkward (prime) batch: exercises the cdiv grid with a partial last block.
    B2, C2, H2, W2 = 3, 4, 8, 8
    x2 = jax.random.normal(kx2, (B2, C2, H2, W2), dtype=jnp.float32)
    n2 = jax.random.normal(kn2, (B2, 1, H2, W2), dtype=jnp.float32)
    z2 = jax.block_until_ready(noise_layer(x2, weight, n2))
    assert jnp.allclose(z2, noise_layer_ref(x2, weight, n2), atol=1e-6, rtol=1e-6)

    # Default path: noise=None -> fresh N(0,1) noise (matches torch.randn branch).
    z3 = jax.block_until_ready(
        noise_layer(x, weight, noise=None, key=jax.random.PRNGKey(1))
    )
    assert z3.shape == (B, C, H, W)

    print("KERNEL_OK")
</pallas_src>

<mosaic_0001>
module attributes {stable_mosaic.version = 11 : i64} {
  func.func @_noise_kernel(%arg0: i32, %arg1: i32, %arg2: memref<1x4x256xf32, #tpu.memory_space<vmem>>, %arg3: memref<1x1x256xf32, #tpu.memory_space<vmem>>, %arg4: memref<4x1xf32, #tpu.memory_space<vmem>>, %arg5: memref<1x4x256xf32, #tpu.memory_space<vmem>>) attributes {dimension_semantics = [#tpu.dimension_semantics<parallel>, #tpu.dimension_semantics<parallel>], iteration_bounds = array<i64: 2, 1>, scalar_prefetch = 0 : i64, scratch_operands = 0 : i64, tpu.core_type = #tpu.core_type<tc>, window_params = [{transform_indices = @transform_0, window_bounds = array<i64: 1, 4, 256>}, {transform_indices = @transform_1, window_bounds = array<i64: 1, 1, 256>}, {pipeline_mode = #tpu.pipeline_mode<synchronous>, transform_indices = @transform_2, window_bounds = array<i64: 4, 1>}, {transform_indices = @transform_3, window_bounds = array<i64: 1, 4, 256>}]} {
    %c0 = arith.constant 0 : index
    %c0_0 = arith.constant 0 : index
    %c0_1 = arith.constant 0 : index
    %0 = vector.load %arg2[%c0, %c0_0, %c0_1] : memref<1x4x256xf32, #tpu.memory_space<vmem>>, vector<1x4x256xf32>
    %c0_2 = arith.constant 0 : index
    %c0_3 = arith.constant 0 : index
    %1 = vector.load %arg4[%c0_2, %c0_3] : memref<4x1xf32, #tpu.memory_space<vmem>>, vector<4x1xf32>
    %2 = vector.shape_cast %1 : vector<4x1xf32> to vector<1x4x1xf32>
    %c0_4 = arith.constant 0 : index
    %c0_5 = arith.constant 0 : index
    %c0_6 = arith.constant 0 : index
    %3 = vector.load %arg3[%c0_4, %c0_5, %c0_6] : memref<1x1x256xf32, #tpu.memory_space<vmem>>, vector<1x1x256xf32>
    %4 = vector.broadcast %2 : vector<1x4x1xf32> to vector<1x4x256xf32>
    %5 = vector.broadcast %3 : vector<1x1x256xf32> to vector<1x4x256xf32>
    %6 = arith.mulf %4, %5 : vector<1x4x256xf32>
    %7 = arith.addf %0, %6 : vector<1x4x256xf32>
    %c0_7 = arith.constant 0 : index
    %c0_8 = arith.constant 0 : index
    %c0_9 = arith.constant 0 : index
    %8 = vector.load %arg5[%c0_7, %c0_8, %c0_9] : memref<1x4x256xf32, #tpu.memory_space<vmem>>, vector<1x4x256xf32>
    tpu.vector_store %arg5[%c0_7, %c0_8, %c0_9], %7 {strides = array<i32>} : memref<1x4x256xf32, #tpu.memory_space<vmem>>, vector<1x4x256xf32>,
    return
  }
  func.func @transform_0(%arg0: i32, %arg1: i32) -> (i32, i32, i32) {
    %c0_i32 = arith.constant 0 : i32
    %c0_i32_0 = arith.constant 0 : i32
    return %arg0, %c0_i32, %arg1 : i32, i32, i32
  }
  func.func @transform_1(%arg0: i32, %arg1: i32) -> (i32, i32, i32) {
    %c0_i32 = arith.constant 0 : i32
    %c0_i32_0 = arith.constant 0 : i32
    return %arg0, %c0_i32, %arg1 : i32, i32, i32
  }
  func.func @transform_2(%arg0: i32, %arg1: i32) -> (i32, i32) {
    %c0_i32 = arith.constant 0 : i32
    %c0_i32_0 = arith.constant 0 : i32
    %c0_i32_1 = arith.constant 0 : i32
    return %c0_i32, %c0_i32_0 : i32, i32
  }
  func.func @transform_3(%arg0: i32, %arg1: i32) -> (i32, i32, i32) {
    %c0_i32 = arith.constant 0 : i32
    %c0_i32_0 = arith.constant 0 : i32
    return %arg0, %c0_i32, %arg1 : i32, i32, i32
  }
}

</mosaic_0001>

<llo_original>
// kernel: tpu_custom_call.1
$region0: #{tpu_custom_call.1}
  #allocation0 [shape = 'u32[]', space=smem, size = 0x4, offset = 0x4, fixed_abs, tag = 'smem constant byte address 0x4 - core index']
  #allocation1 [shape = 'u32[72,128]{1,0:T(1,128)}', space=vmem, size = 0x9000, scoped, tag = 'internal scratch']
  %s0 = inlined_call_operand.hbm [shape: f32[2,4,256], index: 0, kind: input, shape index: {}]
  %s1 = inlined_call_operand.vmem [shape: f32[2,1,256], index: 1, kind: input, shape index: {}]
  %s2 = inlined_call_operand.vmem [shape: f32[4,1], index: 2, kind: input, shape index: {}]
  %s3 = inlined_call_operand.hbm [shape: f32[2,4,256], index: 3, kind: output, shape index: {}]
  %s4 = sld [smem:[#allocation0]]
  $region49: #{tpu_custom_call.1} parent=0
    _
  %s6 = ssub.s32 1, %s4
  %s7 = scalar_select 0, %s6, %s4
  $region1: #{tpu_custom_call.1} parent=0
    #allocation2 [shape = 'u8[8192]{0}', space=vmem, size = 0x2000, scoped, tag = 'input window, operand 0']
    #allocation3 [shape = 's32[2]{0}', space=sflag, size = 0x8, scoped, tag = 'scoped memory for tpu_custom_call.1']
    #allocation4 [shape = 's32[2]{0}', space=sflag, size = 0x8, scoped, tag = 'scoped memory for tpu_custom_call.1']
    #allocation5 [shape = 'u8[8192]{0}', space=vmem, size = 0x2000, scoped, tag = 'output window, operand 0']
    %8 = vsyncpa [#allocation3], 0
    %s9 = scalar_lea.sflag [#allocation3], 1
    %10 = vsyncpa %s9, 0
    %11 = vsyncpa [#allocation4], 0
    %s12 = scalar_lea.sflag [#allocation4], 1
    %13 = vsyncpa %s12, 0
    loop: start=0, step=1, limit=4
    $region2: #{tpu_custom_call.1} parent=1 // loop_pre_header
      _
    $region3: #{tpu_custom_call.1} parent=1 // loop_header
      %s15 = sphi 0, %s19
      %p16 = scmp.ge.s32.totalorder %s15, 4
      %s22 = sphi 0, %s34
      %s23 = sphi 0, %s30
      %s24 = sphi 0, %s22
      %s25 = sphi 0, %s23
      %s26 = sphi 0, %s24
      %s27 = sphi 0, %s25
      %s39 = sphi 0, %s41
      %s42 = sphi 0, %s39
      %s43 = sphi 0, %s42
      %s59 = sphi 0, %s43
      %s67 = sphi 0, %s69
      %s70 = sphi 0, %s67
      %s71 = sphi 0, %s70
      %s87 = sphi 0, %s71
      %s91 = sphi 0, %s91
      %s93 = sphi 0, %s91
      %s94 = sphi 0, %s93
      %s108 = sphi 0, %s94
      %s116 = sphi 0, %s118
      %s119 = sphi 0, %s116
      %s120 = sphi 0, %s119
      %s136 = sphi 0, %s120
    $region4: #{tpu_custom_call.1} parent=1 // loop_header_branch
      %18 = sbr.rel (%p16) target = $region8
    $region5: #{tpu_custom_call.1} parent=1 // loop_body
      %s20 = ssub.s32 %s15, 1
      %s21 = ssub.s32 %s15, 2
      %s28 = sadd.s32 1, %s23
      %p29 = scmp.ge.s32.totalorder %s28, 1
      %s30 = scalar_select %p29, 0, %s28
      %s31 = sadd.s32 1, %s22
      %s32 = scalar_select %p29, %s31, %s22
      %p33 = scmp.ge.s32.totalorder %s32, 2
      %s34 = scalar_select %p33, 0, %s32
      %s35 = ssub.s32 %s22, %s34
      %s36 = ssub.s32 %s23, %s30
      %s37 = sor.u32 %s35, %s36
      %p38 = scmp.eq.s32.totalorder %s37, 0
      %s40 = sadd.s32 %s39, 1
      %s41 = scalar_select %p38, %s39, %s40
      %p44 = pneg %p38
      %p45 = scmp.eq.s32.totalorder %s15, 1
      %p46 = por %p44, %p45
      %p47 = scmp.ne.s32.totalorder %s39, %s42
      %p48 = scmp.eq.s32.totalorder %s15, 0
      %p49 = por %p47, %p48
      %p50 = scmp.ne.s32.totalorder %s39, %s42
      %p51 = scmp.eq.s32.totalorder %s20, 1
      %p52 = por %p50, %p51
      %p53 = scmp.ne.s32.totalorder %s42, %s43
      %p54 = scmp.eq.s32.totalorder %s20, 0
      %p55 = por %p53, %p54
      %p56 = scmp.ne.s32.totalorder %s42, %s43
      %p57 = scmp.eq.s32.totalorder %s21, 1
      %p58 = por %p56, %p57
      %p60 = scmp.ne.s32.totalorder %s43, %s59
      %p61 = scmp.eq.s32.totalorder %s21, 0
      %p62 = por %p60, %p61
      %s63 = ssub.s32 %s22, %s34
      %s64 = ssub.s32 %s23, %s30
      %s65 = sor.u32 %s63, %s64
      %p66 = scmp.eq.s32.totalorder %s65, 0
      %s68 = sadd.s32 %s67, 1
      %s69 = scalar_select %p66, %s67, %s68
      %p72 = pneg %p66
      %p73 = scmp.eq.s32.totalorder %s15, 1
      %p74 = por %p72, %p73
      %p75 = scmp.ne.s32.totalorder %s67, %s70
      %p76 = scmp.eq.s32.totalorder %s15, 0
      %p77 = por %p75, %p76
      %p78 = scmp.ne.s32.totalorder %s67, %s70
      %p79 = scmp.eq.s32.totalorder %s20, 1
      %p80 = por %p78, %p79
      %p81 = scmp.ne.s32.totalorder %s70, %s71
      %p82 = scmp.eq.s32.totalorder %s20, 0
      %p83 = por %p81, %p82
      %p84 = scmp.ne.s32.totalorder %s70, %s71
      %p85 = scmp.eq.s32.totalorder %s21, 1
      %p86 = por %p84, %p85
      %p88 = scmp.ne.s32.totalorder %s71, %s87
      %p89 = scmp.eq.s32.totalorder %s21, 0
      %p90 = por %p88, %p89
      %s92 = sadd.s32 %s91, 1
      %p95 = scmp.eq.s32.totalorder %s15, 1
      %p96 = scmp.ne.s32.totalorder %s91, %s93
      %p97 = scmp.eq.s32.totalorder %s15, 0
      %p98 = por %p96, %p97
      %p99 = scmp.ne.s32.totalorder %s91, %s93
      %p100 = scmp.eq.s32.totalorder %s20, 1
      %p101 = por %p99, %p100
      %p102 = scmp.ne.s32.totalorder %s93, %s94
      %p103 = scmp.eq.s32.totalorder %s20, 0
      %p104 = por %p102, %p103
      %p105 = scmp.ne.s32.totalorder %s93, %s94
      %p106 = scmp.eq.s32.totalorder %s21, 1
      %p107 = por %p105, %p106
      %p109 = scmp.ne.s32.totalorder %s94, %s108
      %p110 = scmp.eq.s32.totalorder %s21, 0
      %p111 = por %p109, %p110
      %s112 = ssub.s32 %s22, %s34
      %s113 = ssub.s32 %s23, %s30
      %s114 = sor.u32 %s112, %s113
      %p115 = scmp.eq.s32.totalorder %s114, 0
      %s117 = sadd.s32 %s116, 1
      %s118 = scalar_select %p115, %s116, %s117
      %p121 = pneg %p115
      %p122 = scmp.eq.s32.totalorder %s15, 1
      %p123 = por %p121, %p122
      %p124 = scmp.ne.s32.totalorder %s116, %s119
      %p125 = scmp.eq.s32.totalorder %s15, 0
      %p126 = por %p124, %p125
      %p127 = scmp.ne.s32.totalorder %s116, %s119
      %p128 = scmp.eq.s32.totalorder %s20, 1
      %p129 = por %p127, %p128
      %p130 = scmp.ne.s32.totalorder %s119, %s120
      %p131 = scmp.eq.s32.totalorder %s20, 0
      %p132 = por %p130, %p131
      %p133 = scmp.ne.s32.totalorder %s119, %s120
      %p134 = scmp.eq.s32.totalorder %s21, 1
      %p135 = por %p133, %p134
      %p137 = scmp.ne.s32.totalorder %s120, %s136
      %p138 = scmp.eq.s32.totalorder %s21, 0
      %p139 = por %p137, %p138
      %p140 = scmp.le.s32.totalorder 1, %s15
      %p141 = scmp.lt.s32.totalorder %s15, 3
      %p142 = pnand %p140, %p141
      %p143 = pneg %p142
      // Predicated region
      $region9: #{tpu_custom_call.1} parent=5 // pred_check
        _
      $region10: #{tpu_custom_call.1} parent=5 // pred_check_branch
        %145 = sbr.rel (%p142) target = $region12
      $region11: #{tpu_custom_call.1} parent=5 // pred_region
        %s146 = ssub.s32 %s15, 1
        // Predicated region
        $region13: #{tpu_custom_call.1} parent=11 // pred_check
          %p147 = pneg %p104
        $region14: #{tpu_custom_call.1} parent=11 // pred_check_branch
          %149 = sbr.rel (%p147) target = $region16
        $region15: #{tpu_custom_call.1} parent=11 // pred_region
          _
        $region16: #{tpu_custom_call.1} parent=11 // pred_fallthru
          _
      $region12: #{tpu_custom_call.1} parent=5 // pred_fallthru
        _
      %p150 = scmp.lt.s32.totalorder %s15, 2
      // Predicated region
      $region17: #{tpu_custom_call.1} parent=5 // pred_check
        %p151 = pneg %p150
      $region18: #{tpu_custom_call.1} parent=5 // pred_check_branch
        %153 = sbr.rel (%p151) target = $region20
      $region19: #{tpu_custom_call.1} parent=5 // pred_region
        // Predicated region
        $region21: #{tpu_custom_call.1} parent=19 // pred_check
          %p154 = pneg %p49
        $region22: #{tpu_custom_call.1} parent=19 // pred_check_branch
          %156 = sbr.rel (%p154) target = $region24
        $region23: #{tpu_custom_call.1} parent=19 // pred_region
          %s157 = sand.u32 %s39, 1
          %s158 = scalar_lea.sflag [#allocation3], %s157
          %s159 = sand.u32 %s39, 1
          %s160 = smul.addr %s159, 8
          %s161 = scalar_lea.vmem [#allocation2], %s160
          %s162 = smul.u32 2, %s23
          %164 = vsyncadd %s158, 0
          %s165 = smul.addr %s22, 2
          %s166 = sadd.s32 %s162, %s165
          %s167 = smul.addr %s166, 4
          %s168 = scalar_lea.hbm %s0, %s167
          %s170 = sshll.u32 %s168, 4
          %s171 = int_to_ptr.hbm [resolvable:$true] %s170
          %s172 = sshll.u32 %s161, 4
          %s173 = int_to_ptr.vmem [resolvable:$true] %s172
          %175 = dma.hbm_to_vmem [thread:$0]  %s171, 128, %s173, %s158
        $region24: #{tpu_custom_call.1} parent=19 // pred_fallthru
          _
        // Predicated region
        $region25: #{tpu_custom_call.1} parent=19 // pred_check
          %p176 = pneg %p77
        $region26: #{tpu_custom_call.1} parent=19 // pred_check_branch
          %178 = sbr.rel (%p176) target = $region28
        $region27: #{tpu_custom_call.1} parent=19 // pred_region
          %s179 = smul.u32 2, %s23
          %p180 = scmp.lt.s32.totalorder %s22, 1
          %s181 = scalar_select %p180, %s22, 1
          %p182 = scmp.lt.s32.totalorder %s179, 1
          %s183 = scalar_select %p182, %s179, 1
          %s184 = smul.addr %s181, 2
          %s185 = sadd.s32 %s183, %s184
          %s186 = scalar_lea.vmem %s1, %s185
          %s187 = smul.u32 2, %s23
        $region28: #{tpu_custom_call.1} parent=19 // pred_fallthru
          _
      $region20: #{tpu_custom_call.1} parent=5 // pred_fallthru
        _
      %p188 = scmp.le.s32.totalorder 1, %s15
      %p189 = scmp.lt.s32.totalorder %s15, 3
      %p190 = pnand %p188, %p189
      %p191 = pneg %p190
      // Predicated region
      $region29: #{tpu_custom_call.1} parent=5 // pred_check
        _
      $region30: #{tpu_custom_call.1} parent=5 // pred_check_branch
        %193 = sbr.rel (%p190) target = $region32
      $region31: #{tpu_custom_call.1} parent=5 // pred_region
        %s194 = ssub.s32 %s15, 1
        %s195 = sand.u32 %s42, 1
        %s196 = scalar_lea.sflag [#allocation3], %s195
        %s197 = sand.u32 %s42, 1
        %s198 = smul.addr %s197, 8
        %s199 = scalar_lea.vmem [#allocation2], %s198
        // Predicated region
        $region33: #{tpu_custom_call.1} parent=31 // pred_check
          %p200 = pneg %p55
        $region34: #{tpu_custom_call.1} parent=31 // pred_check_branch
          %202 = sbr.rel (%p200) target = $region36
        $region35: #{tpu_custom_call.1} parent=31 // pred_region
          %204 = dma.done %s196, 128
        $region36: #{tpu_custom_call.1} parent=31 // pred_fallthru
          _
        %s205 = sand.u32 %s42, 1
        %s206 = scalar_lea.sflag [#allocation3], %s205
        %s207 = sand.u32 %s42, 1
        %s208 = smul.addr %s207, 8
        %s209 = scalar_lea.vmem [#allocation2], %s208
        %p210 = pneg %p55
        %p211 = pneg %p52
        %s212 = smul.u32 2, %s25
        %p213 = scmp.lt.s32.totalorder %s24, 1
        %s214 = scalar_select %p213, %s24, 1
        %p215 = scmp.lt.s32.totalorder %s212, 1
        %s216 = scalar_select %p215, %s212, 1
        %s217 = smul.addr %s214, 2
        %s218 = sadd.s32 %s216, %s217
        %s219 = scalar_lea.vmem %s1, %s218
        %p220 = pneg %p83
        %p221 = pneg %p80
        %p222 = pneg %p104
        %p223 = pneg %p101
        %p224 = pneg %p132
        %p225 = pneg %p129
        %s226 = sand.u32 %s119, 1
        %s227 = scalar_lea.sflag [#allocation4], %s226
        %s228 = sand.u32 %s119, 1
        %s229 = smul.addr %s228, 8
        %s230 = scalar_lea.vmem [#allocation5], %s229
        %s231 = smul.u32 2, %s25
        %s232 = smul.u32 2, %s25
        %p233 = scmp.lt.s32.totalorder %s24, 1
        %s234 = scalar_select %p233, %s24, 1
        %p235 = scmp.lt.s32.totalorder %s232, 1
        %s236 = scalar_select %p235, %s232, 1
        %s237 = smul.addr %s234, 2
        %s238 = sadd.s32 %s236, %s237
        %s239 = scalar_lea.vmem %s1, %s238
        %s240 = smul.u32 2, %s25
        %s241 = smul.u32 2, %s25
        %v242 = vld [vmem:[%s199] sm:$0xff]
        %v243 = vld [vmem:[%s2] sm:$0xf]
        %v244 = vld [vmem:[%s239] sm:$0x3]
        %246 = vset.pattern.permute.xlu0 0
        %247 = vperm.xlu0 %246, %v243
        %v248 = vpop.permute.xlu0 %247
        %v251 = vperm.slane %v244, 0
        %v252 = vperm.slane %v244, 1
        %v255 = vmul.f32 %v248, %v251
        %v256 = vmul.f32 %v248, %v252
        %v259 = vrot.slane %v256, 4
        %vm260 = vcmask 1043456
        %v261 = vsel %vm260, %v255, %v259
        %v263 = vadd.f32 %v242, %v261
        %264 = vst [vmem:[%s230] sm:$0xff] %v263
        %s265 = sand.u32 %s119, 1
        %s266 = scalar_lea.sflag [#allocation4], %s265
        %s267 = sand.u32 %s119, 1
        %s268 = smul.addr %s267, 8
        %s269 = scalar_lea.vmem [#allocation5], %s268
        // Predicated region
        $region37: #{tpu_custom_call.1} parent=31 // pred_check
          %p270 = pneg %p129
        $region38: #{tpu_custom_call.1} parent=31 // pred_check_branch
          %272 = sbr.rel (%p270) target = $region40
        $region39: #{tpu_custom_call.1} parent=31 // pred_region
          %s273 = smul.u32 2, %s25
          %275 = vsyncadd %s266, 0
          %s276 = smul.addr %s24, 2
          %s277 = sadd.s32 %s273, %s276
          %s278 = smul.addr %s277, 4
          %s279 = scalar_lea.hbm %s3, %s278
          %s281 = sshll.u32 %s269, 4
          %s282 = int_to_ptr.vmem [resolvable:$true] %s281
          %s283 = sshll.u32 %s279, 4
          %s284 = int_to_ptr.hbm [resolvable:$true] %s283
          %286 = dma.vmem_to_hbm [thread:$0]  %s282, 128, %s284, %s266
        $region40: #{tpu_custom_call.1} parent=31 // pred_fallthru
          _
      $region32: #{tpu_custom_call.1} parent=5 // pred_fallthru
        _
      %p287 = scmp.le.s32.totalorder 2, %s15
      // Predicated region
      $region41: #{tpu_custom_call.1} parent=5 // pred_check
        %p288 = pneg %p287
      $region42: #{tpu_custom_call.1} parent=5 // pred_check_branch
        %290 = sbr.rel (%p288) target = $region44
      $region43: #{tpu_custom_call.1} parent=5 // pred_region
        %s291 = ssub.s32 %s15, 2
        // Predicated region
        $region45: #{tpu_custom_call.1} parent=43 // pred_check
          %p292 = pneg %p135
        $region46: #{tpu_custom_call.1} parent=43 // pred_check_branch
          %294 = sbr.rel (%p292) target = $region48
        $region47: #{tpu_custom_call.1} parent=43 // pred_region
          %s295 = sand.u32 %s120, 1
          %s296 = scalar_lea.sflag [#allocation4], %s295
          %s297 = sand.u32 %s120, 1
          %s298 = smul.addr %s297, 8
          %s299 = scalar_lea.vmem [#allocation5], %s298
          %301 = dma.done %s296, 128
        $region48: #{tpu_custom_call.1} parent=43 // pred_fallthru
          _
      $region44: #{tpu_custom_call.1} parent=5 // pred_fallthru
        _
    $region6: #{tpu_custom_call.1} parent=1 // loop_footer
      %s19 = sadd.s32 1, %s15
    $region7: #{tpu_custom_call.1} parent=1 // loop_footer_branch
      %14 = sbr.rel target = $region3
    $region8: #{tpu_custom_call.1} parent=1 // loop_exit
      _
    %302 = vsyncpa [#allocation3], 1
    %s303 = scalar_lea.sflag [#allocation3], 1
    %304 = vsyncpa %s303, 1
    %305 = vsyncpa [#allocation4], 1
    %s306 = scalar_lea.sflag [#allocation4], 1
    %307 = vsyncpa %s306, 1

</llo_original>
